<compile_context>
chip_gen: v6e
topology: v6e:2x2x1
jax: 0.10.0
libtpu: 0.0.40
codegen_flags: <defaults>
</compile_context>

<pallas_src>
import jax
import jax.numpy as jnp
from jax.experimental import pallas as pl
from jax.experimental.pallas import tpu as pltpu

# ----------------------- small synthetic configuration -----------------------
NUM_OBJ = 24         # number of ROIs (deliberately NOT a multiple of the row tile)
NUM_CLASSES = 16     # len(classes), index 0 = background (real: 151)
EMBED_DIM = 32       # word-embedding dim (real: 200)
OBJ_DIM = 64         # ROI feature dim   (real: 2048)
POS_DIM = 128        # pos_embed Linear(4, 128)
BN_EPS = 1e-5
PRE_REP_DIM = OBJ_DIM + EMBED_DIM + POS_DIM

LANE = 128                                             # TPU lane width
TILE_N = 16                                            # row tile (multiple of 16 for bf16)
CLS_PAD = ((NUM_CLASSES + LANE - 1) // LANE) * LANE    # lane-padded class dim


def _round_up(x, m):
    return (x + m - 1) // m * m


# ------------------------------- fused kernel ---------------------------------
# One row-tile of:
#   dists = obj_fmaps @ Wf  +  softmax(logits) @ (w_embed @ We)
#         + ReLU(cxcywh @ Wpos' + bpos') @ Wp  +  b_dec
def fused_context_kernel(fmaps_ref, logits_ref, cxcywh_ref,
                         w_dec_f_ref, w_ae_ref, w_pos_ref, b_pos_ref,
                         w_dec_p_ref, b_dec_ref, dists_ref):
    # softmax over the lane-padded (-1e9 filled) class axis; exp/reciprocal on EUP
    l = logits_ref[...].astype(jnp.float32)
    m = jnp.max(l, axis=-1, keepdims=True)
    e = jnp.exp(l - m)
    p = e * pl.reciprocal(jnp.sum(e, axis=-1, keepdims=True), approx=True)

    # decoder_lin(cat(obj_fmaps, obj_embed, pos_embed)) as a sum of partial matmuls
    acc = jnp.dot(fmaps_ref[...], w_dec_f_ref[...],
                  preferred_element_type=jnp.float32)
    acc += jnp.dot(p.astype(jnp.bfloat16), w_ae_ref[...],
                   preferred_element_type=jnp.float32)

    # pos_embed = ReLU(Linear(BN(cxcywh)))  (BN folded into w_pos/b_pos at trace time)
    pos = jnp.dot(cxcywh_ref[...], w_pos_ref[...],
                  preferred_element_type=jnp.float32) + b_pos_ref[...]
    pos = jnp.maximum(pos, jnp.float32(0.0))
    acc += jnp.dot(pos.astype(jnp.bfloat16), w_dec_p_ref[...],
                   preferred_element_type=jnp.float32)

    dists_ref[...] = acc + b_dec_ref[...]


# ------------------------------ parameter init --------------------------------
def init_params(key):
    ks = jax.random.split(key, 7)
    # obj_edge_vectors(classes, wv_dim=embed_dim) -> synthetic deterministic vectors
    w_embed = 0.1 * jax.random.normal(ks[0], (NUM_CLASSES, EMBED_DIM), jnp.float32)
    # BatchNorm1d(4): affine params + non-trivial running stats over cxcywh space
    bn_gamma = jax.random.uniform(ks[1], (1, 4), jnp.float32, 0.5, 1.5)
    bn_beta = 0.1 * jax.random.normal(ks[2], (1, 4), jnp.float32)
    bn_mean = jnp.array([[32.0, 32.0, 16.0, 16.0]], jnp.float32)
    bn_var = jnp.array([[300.0, 300.0, 80.0, 80.0]], jnp.float32)
    # Linear(4, 128): torch default U(-1/sqrt(4), 1/sqrt(4))
    lim_pos = 0.5
    w_pos = jax.random.uniform(ks[3], (4, POS_DIM), jnp.float32, -lim_pos, lim_pos)
    b_pos = jax.random.uniform(ks[4], (1, POS_DIM), jnp.float32, -lim_pos, lim_pos)
    # decoder_lin: Linear(obj_dim + embed_dim + 128, num_classes)
    lim_dec = 1.0 / (PRE_REP_DIM ** 0.5)
    w_dec = jax.random.uniform(ks[5], (PRE_REP_DIM, NUM_CLASSES), jnp.float32,
                               -lim_dec, lim_dec)
    b_dec = jax.random.uniform(ks[6], (1, NUM_CLASSES), jnp.float32,
                               -lim_dec, lim_dec)
    return dict(w_embed=w_embed, bn_gamma=bn_gamma, bn_beta=bn_beta,
                bn_mean=bn_mean, bn_var=bn_var, w_pos=w_pos, b_pos=b_pos,
                w_dec=w_dec, b_dec=b_dec)


def center_size(boxes):
    # neural-motifs convention: (x1,y1,x2,y2) -> (cx, cy, w, h), w = x2-x1+1
    wh = boxes[:, 2:] - boxes[:, :2] + 1.0
    return jnp.concatenate([boxes[:, :2] + 0.5 * wh, wh], axis=1)


# ------------------------------ forward wrapper --------------------------------
def linearized_context_forward(params, obj_fmaps, obj_logits, im_inds,
                               box_priors, obj_labels=None):
    del im_inds, obj_labels  # only used by the (untranslated) RNN / sort / sgdet paths
    n = obj_fmaps.shape[0]
    n_pad = _round_up(n, TILE_N)
    cpad = CLS_PAD - NUM_CLASSES

    # ---- trace-time weight prep (pure algebra / layout, no per-ROI work) ----
    # Fold BatchNorm1d (eval, running stats) into the 4->128 Linear.
    s = params["bn_gamma"] / jnp.sqrt(params["bn_var"] + BN_EPS)           # (1, 4)
    shift = params["bn_beta"] - params["bn_mean"] * s                       # (1, 4)
    w_pos_fold = params["w_pos"] * s.reshape(4, 1)                          # (4, POS_DIM)
    b_pos_fold = shift @ params["w_pos"] + params["b_pos"]                  # (1, POS_DIM)

    # Split decoder weight into its cat() row blocks; lane-pad the class dim.
    w_dec = params["w_dec"]
    w_dec_f = w_dec[:OBJ_DIM]                                               # fmaps block
    w_dec_e = w_dec[OBJ_DIM:OBJ_DIM + EMBED_DIM]                            # embed block
    w_dec_p = w_dec[OBJ_DIM + EMBED_DIM:]                                   # pos block
    # Collapse softmax(logits) @ w_embed @ w_dec_e into a single skinny matmul.
    w_ae = params["w_embed"] @ w_dec_e                                      # (C, C)

    w_dec_f_p = jnp.pad(w_dec_f, ((0, 0), (0, cpad))).astype(jnp.bfloat16)
    w_dec_p_p = jnp.pad(w_dec_p, ((0, 0), (0, cpad))).astype(jnp.bfloat16)
    w_ae_p = jnp.pad(w_ae, ((0, cpad), (0, cpad))).astype(jnp.bfloat16)
    b_dec_p = jnp.pad(params["b_dec"], ((0, 0), (0, cpad)))

    # ---- per-ROI inputs: row-pad to the tile, lane-pad logits, bf16 fmaps stream ----
    fmaps_p = jnp.pad(obj_fmaps, ((0, n_pad - n), (0, 0))).astype(jnp.bfloat16)
    logits_p = jnp.pad(obj_logits, ((0, n_pad - n), (0, cpad)),
                       constant_values=-1e9)          # padded classes get ~0 softmax
    cxcywh_p = jnp.pad(center_size(box_priors), ((0, n_pad - n), (0, 0)))

    dists_pad = pl.pallas_call(
        fused_context_kernel,
        out_shape=jax.ShapeDtypeStruct((n_pad, CLS_PAD), jnp.float32),
        grid=(n_pad // TILE_N,),
        in_specs=[
            pl.BlockSpec((TILE_N, OBJ_DIM), lambda i: (i, 0)),      # obj_fmaps (bf16)
            pl.BlockSpec((TILE_N, CLS_PAD), lambda i: (i, 0)),      # logits (f32, padded)
            pl.BlockSpec((TILE_N, 4), lambda i: (i, 0)),            # cxcywh (f32)
            pl.BlockSpec((OBJ_DIM, CLS_PAD), lambda i: (0, 0)),     # w_dec fmaps blk (bf16)
            pl.BlockSpec((CLS_PAD, CLS_PAD), lambda i: (0, 0)),     # W_ae (bf16)
            pl.BlockSpec((4, POS_DIM), lambda i: (0, 0)),           # w_pos (BN-folded, f32)
            pl.BlockSpec((1, POS_DIM), lambda i: (0, 0)),           # b_pos (BN-folded, f32)
            pl.BlockSpec((POS_DIM, CLS_PAD), lambda i: (0, 0)),     # w_dec pos blk (bf16)
            pl.BlockSpec((1, CLS_PAD), lambda i: (0, 0)),           # b_dec (f32)
        ],
        out_specs=pl.BlockSpec((TILE_N, CLS_PAD), lambda i: (i, 0)),
        compiler_params=pltpu.CompilerParams(
            dimension_semantics=("parallel",)),
    )(fmaps_p, logits_p, cxcywh_p, w_dec_f_p, w_ae_p, w_pos_fold, b_pos_fold,
      w_dec_p_p, b_dec_p)

    obj_dists2 = dists_pad[:n, :NUM_CLASSES]
    # obj_preds = argmax over foreground classes + 1 (done in XLA on the dists slab,
    # avoids a 1-wide masked-store output stream from the kernel)
    obj_preds = (jnp.argmax(obj_dists2[:, 1:], axis=1) + 1).astype(jnp.int32)
    edge_ctx = None  # nl_edge == 0
    return obj_dists2, obj_preds, edge_ctx


# --------------------------------- reference -----------------------------------
def reference_forward(params, obj_fmaps, obj_logits, box_priors):
    obj_embed = jax.nn.softmax(obj_logits, axis=1) @ params["w_embed"]
    x = center_size(box_priors)
    xn = (x - params["bn_mean"]) / jnp.sqrt(params["bn_var"] + BN_EPS)
    xn = xn * params["bn_gamma"] + params["bn_beta"]
    pos = jnp.maximum(xn @ params["w_pos"] + params["b_pos"], 0.0)
    rep = jnp.concatenate([obj_fmaps, obj_embed, pos], axis=1)
    dists = rep @ params["w_dec"] + params["b_dec"]
    preds = jnp.argmax(dists[:, 1:], axis=1) + 1
    return dists, preds.astype(jnp.int32)


if __name__ == "__main__":
    key = jax.random.PRNGKey(0)
    kp, k1, k2, k3, k4 = jax.random.split(key, 5)
    params = init_params(kp)

    obj_fmaps = jax.random.normal(k1, (NUM_OBJ, OBJ_DIM), jnp.float32)
    obj_logits = jax.random.normal(k2, (NUM_OBJ, NUM_CLASSES), jnp.float32)
    im_inds = jnp.zeros((NUM_OBJ,), jnp.int32)
    xy1 = jax.random.uniform(k3, (NUM_OBJ, 2), jnp.float32, 0.0, 40.0)
    wh = jax.random.uniform(k4, (NUM_OBJ, 2), jnp.float32, 1.0, 25.0)
    box_priors = jnp.concatenate([xy1, xy1 + wh], axis=1)

    obj_dists2, obj_preds, edge_ctx = linearized_context_forward(
        params, obj_fmaps, obj_logits, im_inds, box_priors, obj_labels=None)
    jax.block_until_ready((obj_dists2, obj_preds))

    ref_dists, ref_preds = reference_forward(params, obj_fmaps, obj_logits, box_priors)

    assert obj_dists2.shape == (NUM_OBJ, NUM_CLASSES)
    assert obj_preds.shape == (NUM_OBJ,)
    assert edge_ctx is None
    # dists: kernel uses bf16 matmul operands + approx reciprocal; reference is pure f32
    assert jnp.allclose(obj_dists2, ref_dists, rtol=2e-2, atol=2e-2)
    # preds: bf16 rounding may only flip the argmax on numerical near-ties, so require
    # the kernel's pick to be a valid foreground class scoring within tolerance of the
    # reference's best foreground class.
    rows = jnp.arange(NUM_OBJ)
    assert bool(jnp.all(obj_preds >= 1)) and bool(jnp.all(obj_preds < NUM_CLASSES))
    assert bool(jnp.all(ref_dists[rows, obj_preds]
                        >= ref_dists[rows, ref_preds] - 2e-2))
    print("KERNEL_OK")
</pallas_src>

<mosaic_0001>
module attributes {stable_mosaic.version = 11 : i64} {
  func.func @fused_context_kernel(%arg0: i32, %arg1: memref<16x64xbf16, #tpu.memory_space<vmem>>, %arg2: memref<16x128xf32, #tpu.memory_space<vmem>>, %arg3: memref<16x4xf32, #tpu.memory_space<vmem>>, %arg4: memref<64x128xbf16, #tpu.memory_space<vmem>>, %arg5: memref<128x128xbf16, #tpu.memory_space<vmem>>, %arg6: memref<4x128xf32, #tpu.memory_space<vmem>>, %arg7: memref<1x128xf32, #tpu.memory_space<vmem>>, %arg8: memref<128x128xbf16, #tpu.memory_space<vmem>>, %arg9: memref<1x128xf32, #tpu.memory_space<vmem>>, %arg10: memref<16x128xf32, #tpu.memory_space<vmem>>) attributes {dimension_semantics = [#tpu.dimension_semantics<parallel>], iteration_bounds = array<i64: 2>, scalar_prefetch = 0 : i64, scratch_operands = 0 : i64, tpu.core_type = #tpu.core_type<tc>, window_params = [{transform_indices = @transform_0, window_bounds = array<i64: 16, 64>}, {transform_indices = @transform_1, window_bounds = array<i64: 16, 128>}, {transform_indices = @transform_2, window_bounds = array<i64: 16, 4>}, {pipeline_mode = #tpu.pipeline_mode<synchronous>, transform_indices = @transform_3, window_bounds = array<i64: 64, 128>}, {pipeline_mode = #tpu.pipeline_mode<synchronous>, transform_indices = @transform_4, window_bounds = array<i64: 128, 128>}, {pipeline_mode = #tpu.pipeline_mode<synchronous>, transform_indices = @transform_5, window_bounds = array<i64: 4, 128>}, {pipeline_mode = #tpu.pipeline_mode<synchronous>, transform_indices = @transform_6, window_bounds = array<i64: 1, 128>}, {pipeline_mode = #tpu.pipeline_mode<synchronous>, transform_indices = @transform_7, window_bounds = array<i64: 128, 128>}, {pipeline_mode = #tpu.pipeline_mode<synchronous>, transform_indices = @transform_8, window_bounds = array<i64: 1, 128>}, {transform_indices = @transform_9, window_bounds = array<i64: 16, 128>}]} {
    %c0 = arith.constant 0 : index
    %c0_0 = arith.constant 0 : index
    %0 = vector.load %arg2[%c0, %c0_0] : memref<16x128xf32, #tpu.memory_space<vmem>>, vector<16x128xf32>
    %cst = arith.constant dense<0xFF800000> : vector<16xf32>
    %1 = vector.multi_reduction <maximumf>, %0, %cst [1] : vector<16x128xf32> to vector<16xf32>
    %2 = vector.shape_cast %1 : vector<16xf32> to vector<16x1xf32>
    %3 = vector.broadcast %2 : vector<16x1xf32> to vector<16x128xf32>
    %4 = arith.subf %0, %3 : vector<16x128xf32>
    %5 = math.exp %4 : vector<16x128xf32>
    %cst_1 = arith.constant dense<0.000000e+00> : vector<16xf32>
    %6 = vector.multi_reduction <add>, %5, %cst_1 [1] : vector<16x128xf32> to vector<16xf32>
    %7 = vector.shape_cast %6 : vector<16xf32> to vector<16x1xf32>
    %8 = tpu.reciprocal %7 {approx = true} : vector<16x1xf32> -> vector<16x1xf32>
    %9 = vector.broadcast %8 : vector<16x1xf32> to vector<16x128xf32>
    %10 = arith.mulf %5, %9 : vector<16x128xf32>
    %c0_2 = arith.constant 0 : index
    %c0_3 = arith.constant 0 : index
    %11 = vector.load %arg1[%c0_2, %c0_3] : memref<16x64xbf16, #tpu.memory_space<vmem>>, vector<16x64xbf16>
    %c0_4 = arith.constant 0 : index
    %c0_5 = arith.constant 0 : index
    %12 = vector.load %arg4[%c0_4, %c0_5] : memref<64x128xbf16, #tpu.memory_space<vmem>>, vector<64x128xbf16>
    %cst_6 = arith.constant dense<0.000000e+00> : vector<16x128xf32>
    %13 = tpu.matmul %11, %12, %cst_6 {dimension_numbers = #tpu.dot_dimension_numbers<[1], [0], [0], [1], [0, 0, 1, 1], [], []>} : vector<16x64xbf16>, vector<64x128xbf16>, vector<16x128xf32> -> vector<16x128xf32>
    %14 = arith.truncf %10 : vector<16x128xf32> to vector<16x128xbf16>
    %c0_7 = arith.constant 0 : index
    %c0_8 = arith.constant 0 : index
    %15 = vector.load %arg5[%c0_7, %c0_8] : memref<128x128xbf16, #tpu.memory_space<vmem>>, vector<128x128xbf16>
    %cst_9 = arith.constant dense<0.000000e+00> : vector<16x128xf32>
    %16 = tpu.matmul %14, %15, %cst_9 {dimension_numbers = #tpu.dot_dimension_numbers<[1], [0], [0], [1], [0, 0, 1, 1], [], []>} : vector<16x128xbf16>, vector<128x128xbf16>, vector<16x128xf32> -> vector<16x128xf32>
    %17 = arith.addf %13, %16 : vector<16x128xf32>
    %c0_10 = arith.constant 0 : index
    %c0_11 = arith.constant 0 : index
    %18 = vector.load %arg3[%c0_10, %c0_11] : memref<16x4xf32, #tpu.memory_space<vmem>>, vector<16x4xf32>
    %c0_12 = arith.constant 0 : index
    %c0_13 = arith.constant 0 : index
    %19 = vector.load %arg6[%c0_12, %c0_13] : memref<4x128xf32, #tpu.memory_space<vmem>>, vector<4x128xf32>
    %cst_14 = arith.constant dense<0.000000e+00> : vector<16x128xf32>
    %20 = tpu.matmul %18, %19, %cst_14 {dimension_numbers = #tpu.dot_dimension_numbers<[1], [0], [0], [1], [0, 0, 1, 1], [], []>} : vector<16x4xf32>, vector<4x128xf32>, vector<16x128xf32> -> vector<16x128xf32>
    %c0_15 = arith.constant 0 : index
    %c0_16 = arith.constant 0 : index
    %21 = vector.load %arg7[%c0_15, %c0_16] : memref<1x128xf32, #tpu.memory_space<vmem>>, vector<1x128xf32>
    %22 = vector.broadcast %21 : vector<1x128xf32> to vector<16x128xf32>
    %23 = arith.addf %20, %22 : vector<16x128xf32>
    %cst_17 = arith.constant 0.000000e+00 : f32
    %24 = vector.broadcast %cst_17 : f32 to vector<16x128xf32>
    %25 = arith.maximumf %23, %24 : vector<16x128xf32>
    %26 = arith.truncf %25 : vector<16x128xf32> to vector<16x128xbf16>
    %c0_18 = arith.constant 0 : index
    %c0_19 = arith.constant 0 : index
    %27 = vector.load %arg8[%c0_18, %c0_19] : memref<128x128xbf16, #tpu.memory_space<vmem>>, vector<128x128xbf16>
    %cst_20 = arith.constant dense<0.000000e+00> : vector<16x128xf32>
    %28 = tpu.matmul %26, %27, %cst_20 {dimension_numbers = #tpu.dot_dimension_numbers<[1], [0], [0], [1], [0, 0, 1, 1], [], []>} : vector<16x128xbf16>, vector<128x128xbf16>, vector<16x128xf32> -> vector<16x128xf32>
    %29 = arith.addf %17, %28 : vector<16x128xf32>
    %c0_21 = arith.constant 0 : index
    %c0_22 = arith.constant 0 : index
    %30 = vector.load %arg9[%c0_21, %c0_22] : memref<1x128xf32, #tpu.memory_space<vmem>>, vector<1x128xf32>
    %31 = vector.broadcast %30 : vector<1x128xf32> to vector<16x128xf32>
    %32 = arith.addf %29, %31 : vector<16x128xf32>
    %c0_23 = arith.constant 0 : index
    %c0_24 = arith.constant 0 : index
    %33 = vector.load %arg10[%c0_23, %c0_24] : memref<16x128xf32, #tpu.memory_space<vmem>>, vector<16x128xf32>
    tpu.vector_store %arg10[%c0_23, %c0_24], %32 {strides = array<i32>} : memref<16x128xf32, #tpu.memory_space<vmem>>, vector<16x128xf32>,
    return
  }
  func.func @transform_0(%arg0: i32) -> (i32, i32) {
    %c0_i32 = arith.constant 0 : i32
    %c0_i32_0 = arith.constant 0 : i32
    return %arg0, %c0_i32 : i32, i32
  }
  func.func @transform_1(%arg0: i32) -> (i32, i32) {
    %c0_i32 = arith.constant 0 : i32
    %c0_i32_0 = arith.constant 0 : i32
    return %arg0, %c0_i32 : i32, i32
  }
  func.func @transform_2(%arg0: i32) -> (i32, i32) {
    %c0_i32 = arith.constant 0 : i32
    %c0_i32_0 = arith.constant 0 : i32
    return %arg0, %c0_i32 : i32, i32
  }
  func.func @transform_3(%arg0: i32) -> (i32, i32) {
    %c0_i32 = arith.constant 0 : i32
    %c0_i32_0 = arith.constant 0 : i32
    %c0_i32_1 = arith.constant 0 : i32
    return %c0_i32, %c0_i32_0 : i32, i32
  }
  func.func @transform_4(%arg0: i32) -> (i32, i32) {
    %c0_i32 = arith.constant 0 : i32
    %c0_i32_0 = arith.constant 0 : i32
    %c0_i32_1 = arith.constant 0 : i32
    return %c0_i32, %c0_i32_0 : i32, i32
  }
  func.func @transform_5(%arg0: i32) -> (i32, i32) {
    %c0_i32 = arith.constant 0 : i32
    %c0_i32_0 = arith.constant 0 : i32
    %c0_i32_1 = arith.constant 0 : i32
    return %c0_i32, %c0_i32_0 : i32, i32
  }
  func.func @transform_6(%arg0: i32) -> (i32, i32) {
    %c0_i32 = arith.constant 0 : i32
    %c0_i32_0 = arith.constant 0 : i32
    %c0_i32_1 = arith.constant 0 : i32
    return %c0_i32, %c0_i32_0 : i32, i32
  }
  func.func @transform_7(%arg0: i32) -> (i32, i32) {
    %c0_i32 = arith.constant 0 : i32
    %c0_i32_0 = arith.constant 0 : i32
    %c0_i32_1 = arith.constant 0 : i32
    return %c0_i32, %c0_i32_0 : i32, i32
  }
  func.func @transform_8(%arg0: i32) -> (i32, i32) {
    %c0_i32 = arith.constant 0 : i32
    %c0_i32_0 = arith.constant 0 : i32
    %c0_i32_1 = arith.constant 0 : i32
    return %c0_i32, %c0_i32_0 : i32, i32
  }
  func.func @transform_9(%arg0: i32) -> (i32, i32) {
    %c0_i32 = arith.constant 0 : i32
    %c0_i32_0 = arith.constant 0 : i32
    return %arg0, %c0_i32 : i32, i32
  }
}

</mosaic_0001>

<llo_original>
// kernel: tpu_custom_call.1
$region0: #{tpu_custom_call.1}
  #allocation0 [shape = 'u32[]', space=smem, size = 0x4, offset = 0x4, fixed_abs, tag = 'smem constant byte address 0x4 - core index']
  #allocation1 [shape = 'u32[144,128]{1,0:T(1,128)}', space=vmem, size = 0x12000, scoped, tag = 'internal scratch']
  %s0 = inlined_call_operand.hbm [shape: bf16[32,64], index: 0, kind: input, shape index: {}]
  %s1 = inlined_call_operand.vmem [shape: f32[32,128], index: 1, kind: input, shape index: {}]
  %s2 = inlined_call_operand.vmem [shape: f32[32,4], index: 2, kind: input, shape index: {}]
  %s3 = inlined_call_operand.hbm [shape: bf16[64,128], index: 3, kind: input, shape index: {}]
  %s4 = inlined_call_operand.hbm [shape: bf16[128,128], index: 4, kind: input, shape index: {}]
  %s5 = inlined_call_operand.vmem [shape: f32[4,128], index: 5, kind: input, shape index: {}]
  %s6 = inlined_call_operand.vmem [shape: f32[1,128], index: 6, kind: input, shape index: {}]
  %s7 = inlined_call_operand.hbm [shape: bf16[128,128], index: 7, kind: input, shape index: {}]
  %s8 = inlined_call_operand.vmem [shape: f32[1,128], index: 8, kind: input, shape index: {}]
  %s9 = inlined_call_operand.hbm [shape: f32[32,128], index: 9, kind: output, shape index: {}]
  %s10 = sld [smem:[#allocation0]]
  $region85: #{tpu_custom_call.1} parent=0
    _
  %s12 = ssub.s32 1, %s10
  %s13 = scalar_select 0, %s12, %s10
  $region1: #{tpu_custom_call.1} parent=0
    #allocation2 [shape = 'u8[8192]{0}', space=vmem, size = 0x2000, scoped, tag = 'input window, operand 0']
    #allocation3 [shape = 's32[2]{0}', space=sflag, size = 0x8, scoped, tag = 'scoped memory for tpu_custom_call.1']
    #allocation4 [shape = 's32[2]{0}', space=sflag, size = 0x8, scoped, tag = 'scoped memory for tpu_custom_call.1']
    #allocation5 [shape = 'u8[16384]{0}', space=vmem, size = 0x4000, scoped, tag = 'input window, operand 3, single buffered']
    #allocation6 [shape = 's32[1]{0}', space=sflag, size = 0x4, scoped, tag = 'scoped memory for tpu_custom_call.1']
    #allocation7 [shape = 'u8[32768]{0}', space=vmem, size = 0x8000, scoped, tag = 'input window, operand 4, single buffered']
    #allocation8 [shape = 'u8[32768]{0}', space=vmem, size = 0x8000, scoped, tag = 'input window, operand 7, single buffered']
    #allocation9 [shape = 's32[1]{0}', space=sflag, size = 0x4, scoped, tag = 'scoped memory for tpu_custom_call.1']
    #allocation10 [shape = 'u8[16384]{0}', space=vmem, size = 0x4000, scoped, tag = 'output window, operand 0']
    %14 = vsyncpa [#allocation3], 0
    %s15 = scalar_lea.sflag [#allocation3], 1
    %16 = vsyncpa %s15, 0
    %17 = vsyncpa [#allocation6], 0
    %18 = vsyncpa [#allocation9], 0
    %19 = vsyncpa [#allocation4], 0
    %s20 = scalar_lea.sflag [#allocation4], 1
    %21 = vsyncpa %s20, 0
    loop: start=0, step=1, limit=4
    $region2: #{tpu_custom_call.1} parent=1 // loop_pre_header
      _
    $region3: #{tpu_custom_call.1} parent=1 // loop_header
      %s23 = sphi 0, %s27
      %p24 = scmp.ge.s32.totalorder %s23, 4
      %s33 = sphi 0, %s35
      %s36 = sphi 0, %s33
      %s37 = sphi 0, %s36
      %s53 = sphi 0, %s37
      %s59 = sphi 0, %s61
      %s62 = sphi 0, %s59
      %s63 = sphi 0, %s62
      %s79 = sphi 0, %s63
      %s85 = sphi 0, %s87
      %s88 = sphi 0, %s85
      %s89 = sphi 0, %s88
      %s105 = sphi 0, %s89
      %s109 = sphi 0, %s109
      %s111 = sphi 0, %s109
      %s112 = sphi 0, %s111
      %s126 = sphi 0, %s112
      %s130 = sphi 0, %s130
      %s132 = sphi 0, %s130
      %s133 = sphi 0, %s132
      %s147 = sphi 0, %s133
      %s151 = sphi 0, %s151
      %s153 = sphi 0, %s151
      %s154 = sphi 0, %s153
      %s168 = sphi 0, %s154
      %s172 = sphi 0, %s172
      %s174 = sphi 0, %s172
      %s175 = sphi 0, %s174
      %s189 = sphi 0, %s175
      %s193 = sphi 0, %s193
      %s195 = sphi 0, %s193
      %s196 = sphi 0, %s195
      %s210 = sphi 0, %s196
      %s214 = sphi 0, %s214
      %s216 = sphi 0, %s214
      %s217 = sphi 0, %s216
      %s231 = sphi 0, %s217
      %s237 = sphi 0, %s239
      %s240 = sphi 0, %s237
      %s241 = sphi 0, %s240
      %s257 = sphi 0, %s241
    $region4: #{tpu_custom_call.1} parent=1 // loop_header_branch
      %26 = sbr.rel (%p24) target = $region8
    $region5: #{tpu_custom_call.1} parent=1 // loop_body
      %s28 = ssub.s32 %s23, 1
      %s29 = ssub.s32 %s23, 2
      %s30 = sadd.s32 %s23, 1
      %s31 = ssub.s32 %s23, %s30
      %p32 = scmp.eq.s32.totalorder %s31, 0
      %s34 = sadd.s32 %s33, 1
      %s35 = scalar_select %p32, %s33, %s34
      %p38 = pneg %p32
      %p39 = scmp.eq.s32.totalorder %s23, 1
      %p40 = por %p38, %p39
      %p41 = scmp.ne.s32.totalorder %s33, %s36
      %p42 = scmp.eq.s32.totalorder %s23, 0
      %p43 = por %p41, %p42
      %p44 = scmp.ne.s32.totalorder %s33, %s36
      %p45 = scmp.eq.s32.totalorder %s28, 1
      %p46 = por %p44, %p45
      %p47 = scmp.ne.s32.totalorder %s36, %s37
      %p48 = scmp.eq.s32.totalorder %s28, 0
      %p49 = por %p47, %p48
      %p50 = scmp.ne.s32.totalorder %s36, %s37
      %p51 = scmp.eq.s32.totalorder %s29, 1
      %p52 = por %p50, %p51
      %p54 = scmp.ne.s32.totalorder %s37, %s53
      %p55 = scmp.eq.s32.totalorder %s29, 0
      %p56 = por %p54, %p55
      %s57 = ssub.s32 %s23, %s30
      %p58 = scmp.eq.s32.totalorder %s57, 0
      %s60 = sadd.s32 %s59, 1
      %s61 = scalar_select %p58, %s59, %s60
      %p64 = pneg %p58
      %p65 = scmp.eq.s32.totalorder %s23, 1
      %p66 = por %p64, %p65
      %p67 = scmp.ne.s32.totalorder %s59, %s62
      %p68 = scmp.eq.s32.totalorder %s23, 0
      %p69 = por %p67, %p68
      %p70 = scmp.ne.s32.totalorder %s59, %s62
      %p71 = scmp.eq.s32.totalorder %s28, 1
      %p72 = por %p70, %p71
      %p73 = scmp.ne.s32.totalorder %s62, %s63
      %p74 = scmp.eq.s32.totalorder %s28, 0
      %p75 = por %p73, %p74
      %p76 = scmp.ne.s32.totalorder %s62, %s63
      %p77 = scmp.eq.s32.totalorder %s29, 1
      %p78 = por %p76, %p77
      %p80 = scmp.ne.s32.totalorder %s63, %s79
      %p81 = scmp.eq.s32.totalorder %s29, 0
      %p82 = por %p80, %p81
      %s83 = ssub.s32 %s23, %s30
      %p84 = scmp.eq.s32.totalorder %s83, 0
      %s86 = sadd.s32 %s85, 1
      %s87 = scalar_select %p84, %s85, %s86
      %p90 = pneg %p84
      %p91 = scmp.eq.s32.totalorder %s23, 1
      %p92 = por %p90, %p91
      %p93 = scmp.ne.s32.totalorder %s85, %s88
      %p94 = scmp.eq.s32.totalorder %s23, 0
      %p95 = por %p93, %p94
      %p96 = scmp.ne.s32.totalorder %s85, %s88
      %p97 = scmp.eq.s32.totalorder %s28, 1
      %p98 = por %p96, %p97
      %p99 = scmp.ne.s32.totalorder %s88, %s89
      %p100 = scmp.eq.s32.totalorder %s28, 0
      %p101 = por %p99, %p100
      %p102 = scmp.ne.s32.totalorder %s88, %s89
      %p103 = scmp.eq.s32.totalorder %s29, 1
      %p104 = por %p102, %p103
      %p106 = scmp.ne.s32.totalorder %s89, %s105
      %p107 = scmp.eq.s32.totalorder %s29, 0
      %p108 = por %p106, %p107
      %s110 = sadd.s32 %s109, 1
      %p113 = scmp.eq.s32.totalorder %s23, 1
      %p114 = scmp.ne.s32.totalorder %s109, %s111
      %p115 = scmp.eq.s32.totalorder %s23, 0
      %p116 = por %p114, %p115
      %p117 = scmp.ne.s32.totalorder %s109, %s111
      %p118 = scmp.eq.s32.totalorder %s28, 1
      %p119 = por %p117, %p118
      %p120 = scmp.ne.s32.totalorder %s111, %s112
      %p121 = scmp.eq.s32.totalorder %s28, 0
      %p122 = por %p120, %p121
      %p123 = scmp.ne.s32.totalorder %s111, %s112
      %p124 = scmp.eq.s32.totalorder %s29, 1
      %p125 = por %p123, %p124
      %p127 = scmp.ne.s32.totalorder %s112, %s126
      %p128 = scmp.eq.s32.totalorder %s29, 0
      %p129 = por %p127, %p128
      %s131 = sadd.s32 %s130, 1
      %p134 = scmp.eq.s32.totalorder %s23, 1
      %p135 = scmp.ne.s32.totalorder %s130, %s132
      %p136 = scmp.eq.s32.totalorder %s23, 0
      %p137 = por %p135, %p136
      %p138 = scmp.ne.s32.totalorder %s130, %s132
      %p139 = scmp.eq.s32.totalorder %s28, 1
      %p140 = por %p138, %p139
      %p141 = scmp.ne.s32.totalorder %s132, %s133
      %p142 = scmp.eq.s32.totalorder %s28, 0
      %p143 = por %p141, %p142
      %p144 = scmp.ne.s32.totalorder %s132, %s133
      %p145 = scmp.eq.s32.totalorder %s29, 1
      %p146 = por %p144, %p145
      %p148 = scmp.ne.s32.totalorder %s133, %s147
      %p149 = scmp.eq.s32.totalorder %s29, 0
      %p150 = por %p148, %p149
      %s152 = sadd.s32 %s151, 1
      %p155 = scmp.eq.s32.totalorder %s23, 1
      %p156 = scmp.ne.s32.totalorder %s151, %s153
      %p157 = scmp.eq.s32.totalorder %s23, 0
      %p158 = por %p156, %p157
      %p159 = scmp.ne.s32.totalorder %s151, %s153
      %p160 = scmp.eq.s32.totalorder %s28, 1
      %p161 = por %p159, %p160
      %p162 = scmp.ne.s32.totalorder %s153, %s154
      %p163 = scmp.eq.s32.totalorder %s28, 0
      %p164 = por %p162, %p163
      %p165 = scmp.ne.s32.totalorder %s153, %s154
      %p166 = scmp.eq.s32.totalorder %s29, 1
      %p167 = por %p165, %p166
      %p169 = scmp.ne.s32.totalorder %s154, %s168
      %p170 = scmp.eq.s32.totalorder %s29, 0
      %p171 = por %p169, %p170
      %s173 = sadd.s32 %s172, 1
      %p176 = scmp.eq.s32.totalorder %s23, 1
      %p177 = scmp.ne.s32.totalorder %s172, %s174
      %p178 = scmp.eq.s32.totalorder %s23, 0
      %p179 = por %p177, %p178
      %p180 = scmp.ne.s32.totalorder %s172, %s174
      %p181 = scmp.eq.s32.totalorder %s28, 1
      %p182 = por %p180, %p181
      %p183 = scmp.ne.s32.totalorder %s174, %s175
      %p184 = scmp.eq.s32.totalorder %s28, 0
      %p185 = por %p183, %p184
      %p186 = scmp.ne.s32.totalorder %s174, %s175
      %p187 = scmp.eq.s32.totalorder %s29, 1
      %p188 = por %p186, %p187
      %p190 = scmp.ne.s32.totalorder %s175, %s189
      %p191 = scmp.eq.s32.totalorder %s29, 0
      %p192 = por %p190, %p191
      %s194 = sadd.s32 %s193, 1
      %p197 = scmp.eq.s32.totalorder %s23, 1
      %p198 = scmp.ne.s32.totalorder %s193, %s195
      %p199 = scmp.eq.s32.totalorder %s23, 0
      %p200 = por %p198, %p199
      %p201 = scmp.ne.s32.totalorder %s193, %s195
      %p202 = scmp.eq.s32.totalorder %s28, 1
      %p203 = por %p201, %p202
      %p204 = scmp.ne.s32.totalorder %s195, %s196
      %p205 = scmp.eq.s32.totalorder %s28, 0
      %p206 = por %p204, %p205
      %p207 = scmp.ne.s32.totalorder %s195, %s196
      %p208 = scmp.eq.s32.totalorder %s29, 1
      %p209 = por %p207, %p208
      %p211 = scmp.ne.s32.totalorder %s196, %s210
      %p212 = scmp.eq.s32.totalorder %s29, 0
      %p213 = por %p211, %p212
      %s215 = sadd.s32 %s214, 1
      %p218 = scmp.eq.s32.totalorder %s23, 1
      %p219 = scmp.ne.s32.totalorder %s214, %s216
      %p220 = scmp.eq.s32.totalorder %s23, 0
      %p221 = por %p219, %p220
      %p222 = scmp.ne.s32.totalorder %s214, %s216
      %p223 = scmp.eq.s32.totalorder %s28, 1
      %p224 = por %p222, %p223
      %p225 = scmp.ne.s32.totalorder %s216, %s217
      %p226 = scmp.eq.s32.totalorder %s28, 0
      %p227 = por %p225, %p226
      %p228 = scmp.ne.s32.totalorder %s216, %s217
      %p229 = scmp.eq.s32.totalorder %s29, 1
      %p230 = por %p228, %p229
      %p232 = scmp.ne.s32.totalorder %s217, %s231
      %p233 = scmp.eq.s32.totalorder %s29, 0
      %p234 = por %p232, %p233
      %s235 = ssub.s32 %s23, %s30
      %p236 = scmp.eq.s32.totalorder %s235, 0
      %s238 = sadd.s32 %s237, 1
      %s239 = scalar_select %p236, %s237, %s238
      %p242 = pneg %p236
      %p243 = scmp.eq.s32.totalorder %s23, 1
      %p244 = por %p242, %p243
      %p245 = scmp.ne.s32.totalorder %s237, %s240
      %p246 = scmp.eq.s32.totalorder %s23, 0
      %p247 = por %p245, %p246
      %p248 = scmp.ne.s32.totalorder %s237, %s240
      %p249 = scmp.eq.s32.totalorder %s28, 1
      %p250 = por %p248, %p249
      %p251 = scmp.ne.s32.totalorder %s240, %s241
      %p252 = scmp.eq.s32.totalorder %s28, 0
      %p253 = por %p251, %p252
      %p254 = scmp.ne.s32.totalorder %s240, %s241
      %p255 = scmp.eq.s32.totalorder %s29, 1
      %p256 = por %p254, %p255
      %p258 = scmp.ne.s32.totalorder %s241, %s257
      %p259 = scmp.eq.s32.totalorder %s29, 0
      %p260 = por %p258, %p259
      %p261 = scmp.le.s32.totalorder 1, %s23
      %p262 = scmp.lt.s32.totalorder %s23, 3
      %p263 = pnand %p261, %p262
      %p264 = pneg %p263
      // Predicated region
      $region9: #{tpu_custom_call.1} parent=5 // pred_check
        _
      $region10: #{tpu_custom_call.1} parent=5 // pred_check_branch
        %266 = sbr.rel (%p263) target = $region12
      $region11: #{tpu_custom_call.1} parent=5 // pred_region
        %s267 = ssub.s32 %s23, 1
        // Predicated region
        $region13: #{tpu_custom_call.1} parent=11 // pred_check
          %p268 = pneg %p122
        $region14: #{tpu_custom_call.1} parent=11 // pred_check_branch
          %270 = sbr.rel (%p268) target = $region16
        $region15: #{tpu_custom_call.1} parent=11 // pred_region
          %s272 = ssub.s32 512, 512
          %273 = vsyncadd [#allocation6], %s272
          %s274 = sshll.u32 [#allocation5], 4
          %s275 = int_to_ptr.vmem [resolvable:$true] %s274
          %280 = dma.hbm_to_vmem [thread:$0]  %s3, 512, %s275, [#allocation6], 64, 64, 4
        $region16: #{tpu_custom_call.1} parent=11 // pred_fallthru
          _
        // Predicated region
        $region17: #{tpu_custom_call.1} parent=11 // pred_check
          %p281 = pneg %p143
        $region18: #{tpu_custom_call.1} parent=11 // pred_check_branch
          %283 = sbr.rel (%p281) target = $region20
        $region19: #{tpu_custom_call.1} parent=11 // pred_region
          %s285 = ssub.s32 1024, 1024
          %286 = vsyncadd [#allocation6], %s285
          %s287 = sshll.u32 [#allocation7], 4
          %s288 = int_to_ptr.vmem [resolvable:$true] %s287
          %293 = dma.hbm_to_vmem [thread:$0]  %s4, 1024, %s288, [#allocation6], 64, 64, 4
        $region20: #{tpu_custom_call.1} parent=11 // pred_fallthru
          _
        // Predicated region
        $region21: #{tpu_custom_call.1} parent=11 // pred_check
          %p294 = pneg %p164
        $region22: #{tpu_custom_call.1} parent=11 // pred_check_branch
          %296 = sbr.rel (%p294) target = $region24
        $region23: #{tpu_custom_call.1} parent=11 // pred_region
          _
        $region24: #{tpu_custom_call.1} parent=11 // pred_fallthru
          _
        // Predicated region
        $region25: #{tpu_custom_call.1} parent=11 // pred_check
          %p297 = pneg %p185
        $region26: #{tpu_custom_call.1} parent=11 // pred_check_branch
          %299 = sbr.rel (%p297) target = $region28
        $region27: #{tpu_custom_call.1} parent=11 // pred_region
          _
        $region28: #{tpu_custom_call.1} parent=11 // pred_fallthru
          _
        // Predicated region
        $region29: #{tpu_custom_call.1} parent=11 // pred_check
          %p300 = pneg %p206
        $region30: #{tpu_custom_call.1} parent=11 // pred_check_branch
          %302 = sbr.rel (%p300) target = $region32
        $region31: #{tpu_custom_call.1} parent=11 // pred_region
          %s304 = ssub.s32 1024, 1024
          %305 = vsyncadd [#allocation9], %s304
          %s306 = sshll.u32 [#allocation8], 4
          %s307 = int_to_ptr.vmem [resolvable:$true] %s306
          %312 = dma.hbm_to_vmem [thread:$0]  %s7, 1024, %s307, [#allocation9], 64, 64, 4
        $region32: #{tpu_custom_call.1} parent=11 // pred_fallthru
          _
        // Predicated region
        $region33: #{tpu_custom_call.1} parent=11 // pred_check
          %p313 = pneg %p227
        $region34: #{tpu_custom_call.1} parent=11 // pred_check_branch
          %315 = sbr.rel (%p313) target = $region36
        $region35: #{tpu_custom_call.1} parent=11 // pred_region
          _
        $region36: #{tpu_custom_call.1} parent=11 // pred_fallthru
          _
      $region12: #{tpu_custom_call.1} parent=5 // pred_fallthru
        _
      %p316 = scmp.lt.s32.totalorder %s23, 2
      // Predicated region
      $region37: #{tpu_custom_call.1} parent=5 // pred_check
        %p317 = pneg %p316
      $region38: #{tpu_custom_call.1} parent=5 // pred_check_branch
        %319 = sbr.rel (%p317) target = $region40
      $region39: #{tpu_custom_call.1} parent=5 // pred_region
        // Predicated region
        $region41: #{tpu_custom_call.1} parent=39 // pred_check
          %p320 = pneg %p43
        $region42: #{tpu_custom_call.1} parent=39 // pred_check_branch
          %322 = sbr.rel (%p320) target = $region44
        $region43: #{tpu_custom_call.1} parent=39 // pred_region
          %s323 = sand.u32 %s33, 1
          %s324 = scalar_lea.sflag [#allocation3], %s323
          %s325 = sand.u32 %s33, 1
          %s326 = smul.addr %s325, 8
          %s327 = scalar_lea.vmem [#allocation2], %s326
          %s328 = smul.u32 2, %s23
          %s330 = ssub.s32 128, 128
          %331 = vsyncadd %s324, %s330
          %s332 = smul.addr %s328, 64
          %s333 = scalar_lea.hbm %s0, %s332
          %s334 = sshll.u32 %s327, 4
          %s335 = int_to_ptr.vmem [resolvable:$true] %s334
          %340 = dma.hbm_to_vmem [thread:$0]  %s333, 128, %s335, %s324, 64, 64, 4
        $region44: #{tpu_custom_call.1} parent=39 // pred_fallthru
          _
        // Predicated region
        $region45: #{tpu_custom_call.1} parent=39 // pred_check
          %p341 = pneg %p69
        $region46: #{tpu_custom_call.1} parent=39 // pred_check_branch
          %343 = sbr.rel (%p341) target = $region48
        $region47: #{tpu_custom_call.1} parent=39 // pred_region
          %s344 = smul.u32 2, %s23
          %p345 = scmp.lt.s32.totalorder %s344, 3
          %s346 = scalar_select %p345, %s344, 3
          %s347 = smul.addr %s346, 8
          %s348 = scalar_lea.vmem %s1, %s347
          %s349 = smul.u32 2, %s23
        $region48: #{tpu_custom_call.1} parent=39 // pred_fallthru
          _
        // Predicated region
        $region49: #{tpu_custom_call.1} parent=39 // pred_check
          %p350 = pneg %p95
        $region50: #{tpu_custom_call.1} parent=39 // pred_check_branch
          %352 = sbr.rel (%p350) target = $region52
        $region51: #{tpu_custom_call.1} parent=39 // pred_region
          %s353 = smul.u32 2, %s23
          %p354 = scmp.lt.s32.totalorder %s353, 3
          %s355 = scalar_select %p354, %s353, 3
          %s356 = smul.addr %s355, 8
          %s357 = scalar_lea.vmem %s2, %s356
          %s358 = smul.u32 2, %s23
        $region52: #{tpu_custom_call.1} parent=39 // pred_fallthru
          _
      $region40: #{tpu_custom_call.1} parent=5 // pred_fallthru
        _
      %p359 = scmp.le.s32.totalorder 1, %s23
      %p360 = scmp.lt.s32.totalorder %s23, 3
      %p361 = pnand %p359, %p360
      %p362 = pneg %p361
      // Predicated region
      $region53: #{tpu_custom_call.1} parent=5 // pred_check
        _
      $region54: #{tpu_custom_call.1} parent=5 // pred_check_branch
        %364 = sbr.rel (%p361) target = $region56
      $region55: #{tpu_custom_call.1} parent=5 // pred_region
        %s365 = ssub.s32 %s23, 1
        %s366 = sand.u32 %s36, 1
        %s367 = scalar_lea.sflag [#allocation3], %s366
        %s368 = sand.u32 %s36, 1
        %s369 = smul.addr %s368, 8
        %s370 = scalar_lea.vmem [#allocation2], %s369
        // Predicated region
        $region57: #{tpu_custom_call.1} parent=55 // pred_check
          %p371 = pneg %p49
        $region58: #{tpu_custom_call.1} parent=55 // pred_check_branch
          %373 = sbr.rel (%p371) target = $region60
        $region59: #{tpu_custom_call.1} parent=55 // pred_region
          %374 = dma.done %s367, 128
        $region60: #{tpu_custom_call.1} parent=55 // pred_fallthru
          _
        // Predicated region
        $region61: #{tpu_custom_call.1} parent=55 // pred_check
          %p375 = pneg %p122
        $region62: #{tpu_custom_call.1} parent=55 // pred_check_branch
          %377 = sbr.rel (%p375) target = $region64
        $region63: #{tpu_custom_call.1} parent=55 // pred_region
          %378 = dma.done [#allocation6], 512
        $region64: #{tpu_custom_call.1} parent=55 // pred_fallthru
          _
        // Predicated region
        $region65: #{tpu_custom_call.1} parent=55 // pred_check
          %p379 = pneg %p143
        $region66: #{tpu_custom_call.1} parent=55 // pred_check_branch
          %381 = sbr.rel (%p379) target = $region68
        $region67: #{tpu_custom_call.1} parent=55 // pred_region
          %382 = dma.done [#allocation6], 1024
        $region68: #{tpu_custom_call.1} parent=55 // pred_fallthru
          _
        // Predicated region
        $region69: #{tpu_custom_call.1} parent=55 // pred_check
          %p383 = pneg %p206
        $region70: #{tpu_custom_call.1} parent=55 // pred_check_branch
          %385 = sbr.rel (%p383) target = $region72
        $region71: #{tpu_custom_call.1} parent=55 // pred_region
          %386 = dma.done [#allocation9], 1024
        $region72: #{tpu_custom_call.1} parent=55 // pred_fallthru
          _
        %s387 = sand.u32 %s36, 1
        %s388 = scalar_lea.sflag [#allocation3], %s387
        %s389 = sand.u32 %s36, 1
        %s390 = smul.addr %s389, 8
        %s391 = scalar_lea.vmem [#allocation2], %s390
        %p392 = pneg %p49
        %p393 = pneg %p46
        %s394 = smul.u32 2, %s28
        %p395 = scmp.lt.s32.totalorder %s394, 3
        %s396 = scalar_select %p395, %s394, 3
        %s397 = smul.addr %s396, 8
        %s398 = scalar_lea.vmem %s1, %s397
        %p399 = pneg %p75
        %p400 = pneg %p72
        %s401 = smul.u32 2, %s28
        %p402 = scmp.lt.s32.totalorder %s401, 3
        %s403 = scalar_select %p402, %s401, 3
        %s404 = smul.addr %s403, 8
        %s405 = scalar_lea.vmem %s2, %s404
        %p406 = pneg %p101
        %p407 = pneg %p98
        %p408 = pneg %p122
        %p409 = pneg %p119
        %p410 = pneg %p143
        %p411 = pneg %p140
        %p412 = pneg %p164
        %p413 = pneg %p161
        %p414 = pneg %p185
        %p415 = pneg %p182
        %p416 = pneg %p206
        %p417 = pneg %p203
        %p418 = pneg %p227
        %p419 = pneg %p224
        %p420 = pneg %p253
        %p421 = pneg %p250
        %s422 = sand.u32 %s240, 1
        %s423 = scalar_lea.sflag [#allocation4], %s422
        %s424 = sand.u32 %s240, 1
        %s425 = smul.addr %s424, 16
        %s426 = scalar_lea.vmem [#allocation10], %s425
        %s427 = smul.u32 2, %s28
        %s428 = smul.u32 2, %s28
        %p429 = scmp.lt.s32.totalorder %s428, 3
        %s430 = scalar_select %p429, %s428, 3
        %s431 = smul.addr %s430, 8
        %s432 = scalar_lea.vmem %s1, %s431
        %s433 = smul.u32 2, %s28
        %s434 = smul.u32 2, %s28
        %p435 = scmp.lt.s32.totalorder %s434, 3
        %s436 = scalar_select %p435, %s434, 3
        %s437 = smul.addr %s436, 8
        %s438 = scalar_lea.vmem %s2, %s437
        %s439 = smul.u32 2, %s28
        %s440 = smul.u32 2, %s28
        %v442 = vld [vmem:[%s432] sm:$0xff]
        %v443 = vld [vmem:[%s432 + $0x8] sm:$0xff]
        %444 = vmax.xlane.f32.xlu0 %v442
        %v445 = vpop.xlane.xlu0 %444
        %446 = vmax.xlane.f32.xlu0 %v443
        %v447 = vpop.xlane.xlu0 %446
        %v448 = vsub.f32 %v442, %v445
        %v449 = vsub.f32 %v443, %v447
        %v450 = vmul.f32 %v448, 1.442695
        %v451 = vpow.pop %v450
        %v452 = vmul.f32 %v449, 1.442695
        %v453 = vpow.pop %v452
        %454 = vadd.xlane.f32.xlu0 %v451
        %v455 = vpop.xlane.xlu0 %454
        %456 = vadd.xlane.f32.xlu0 %v453
        %v457 = vpop.xlane.xlu0 %456
        %v458 = vrcp.pop %v455
        %v459 = vrcp.pop %v457
        %v460 = vmul.f32 %v451, %v458
        %v461 = vmul.f32 %v453, %v459
        %v462 = vld [vmem:[%s370] sm:$0xf]
        %v463 = vld [vmem:[%s370 + $0x4] sm:$0xf]
        %v464 = vld [vmem:[#allocation5] sm:$0xf]
        %v465 = vld [vmem:[#allocation5 + $0x4] sm:$0xf]
        %v466 = vld [vmem:[#allocation5 + $0x8] sm:$0xf]
        %v467 = vld [vmem:[#allocation5 + $0xc] sm:$0xf]
        %v468 = vld [vmem:[#allocation5 + $0x10] sm:$0xf]
        %v469 = vld [vmem:[#allocation5 + $0x14] sm:$0xf]
        %v470 = vld [vmem:[#allocation5 + $0x18] sm:$0xf]
        %v471 = vld [vmem:[#allocation5 + $0x1c] sm:$0xf]
        %v472 = vpack.c.bf16 %v461, %v460
        %v473 = vld [vmem:[#allocation7] sm:$0xf]
        %v474 = vld [vmem:[#allocation7 + $0x4] sm:$0xf]
        %v475 = vld [vmem:[#allocation7 + $0x8] sm:$0xf]
        %v476 = vld [vmem:[#allocation7 + $0xc] sm:$0xf]
        %v477 = vld [vmem:[#allocation7 + $0x10] sm:$0xf]
        %v478 = vld [vmem:[#allocation7 + $0x14] sm:$0xf]
        %v479 = vld [vmem:[#allocation7 + $0x18] sm:$0xf]
        %v480 = vld [vmem:[#allocation7 + $0x1c] sm:$0xf]
        %v481 = vld [vmem:[#allocation7 + $0x20] sm:$0xf]
        %v482 = vld [vmem:[#allocation7 + $0x24] sm:$0xf]
        %v483 = vld [vmem:[#allocation7 + $0x28] sm:$0xf]
        %v484 = vld [vmem:[#allocation7 + $0x2c] sm:$0xf]
        %v485 = vld [vmem:[#allocation7 + $0x30] sm:$0xf]
        %v486 = vld [vmem:[#allocation7 + $0x34] sm:$0xf]
        %v487 = vld [vmem:[#allocation7 + $0x38] sm:$0xf]
        %v488 = vld [vmem:[#allocation7 + $0x3c] sm:$0xf]
        %v505 = vunpack.c.l.b16 %v473
        %v506 = vunpack.c.l.b16 %v474
        %v507 = vunpack.c.l.b16 %v475
        %v508 = vunpack.c.l.b16 %v476
        %v509 = vunpack.c.l.b16 %v477
        %v510 = vunpack.c.l.b16 %v478
        %v511 = vunpack.c.l.b16 %v479
        %v512 = vunpack.c.l.b16 %v480
        %v513 = vunpack.c.l.b16 %v481
        %v514 = vunpack.c.l.b16 %v482
        %v515 = vunpack.c.l.b16 %v483
        %v516 = vunpack.c.l.b16 %v484
        %v517 = vunpack.c.l.b16 %v485
        %v518 = vunpack.c.l.b16 %v486
        %v519 = vunpack.c.l.b16 %v487
        %v520 = vunpack.c.l.b16 %v488
        %v521 = vpack.c.b16 %v506, %v505
        %v522 = vpack.c.b16 %v508, %v507
        %v523 = vpack.c.b16 %v510, %v509
        %v524 = vpack.c.b16 %v512, %v511
        %v525 = vpack.c.b16 %v514, %v513
        %v526 = vpack.c.b16 %v516, %v515
        %v527 = vpack.c.b16 %v518, %v517
        %v528 = vpack.c.b16 %v520, %v519
        %537 = vmatprep.subr.bf16.mxu0 0
        %538 = vmatpush1.bf16.msra.mxu0 %v528
        %539 = vmatprep.subr.bf16.mxu0 0
        %540 = vmatpush1.bf16.msra.mxu0 %v527
        %541 = vmatprep.subr.bf16.mxu0 0
        %542 = vmatpush1.bf16.msra.mxu0 %v526
        %543 = vmatprep.subr.bf16.mxu0 0
        %544 = vmatpush1.bf16.msra.mxu0 %v525
        %545 = vmatprep.subr.bf16.mxu0 0
        %546 = vmatpush1.bf16.msra.mxu0 %v524
        %547 = vmatprep.subr.bf16.mxu0 0
        %548 = vmatpush1.bf16.msra.mxu0 %v523
        %549 = vmatprep.subr.bf16.mxu0 0
        %550 = vmatpush1.bf16.msra.mxu0 %v522
        %551 = vmatprep.subr.bf16.mxu0 0
        %552 = vmatpush1.bf16.msra.mxu0 %v521
        %553 = vmatprep.subr.bf16.mxu0 0
        %554 = vmatpush2.bf16.msra.mxu0 0
        %555 = vmatprep.subr.bf16.mxu0 0
        %556 = vmatpush2.bf16.msra.mxu0 0
        %557 = vmatprep.subr.bf16.mxu0 0
        %558 = vmatpush2.bf16.msra.mxu0 0
        %559 = vmatprep.subr.bf16.mxu0 0
        %560 = vmatpush2.bf16.msra.mxu0 0
        %561 = vmatprep.subr.bf16.mxu0 0
        %562 = vmatpush2.bf16.msra.mxu0 0
        %563 = vmatprep.subr.bf16.mxu0 0
        %564 = vmatpush2.bf16.msra.mxu0 0
        %565 = vmatprep.subr.bf16.mxu0 0
        %566 = vmatpush2.bf16.msra.mxu0 0
        %567 = vmatprep.subr.bf16.mxu0 0
        %568 = vmatpush2.bf16.msra.mxu0 0
        %569 = vmatprep.mubr.bf16.mxu0 0
        %570 = vmatmul.mubr.bf16.gmra.mxu0 %v472
        %v571 = vpop.f32.mrf.mxu0
        %v572 = vadd.f32 0.0, %v571
        %v573 = vpop.f32.mrf.mxu0
        %v574 = vpop.f32.mrf.mxu0
        %v575 = vadd.f32 0.0, %v574
        %v576 = vpop.f32.mrf.mxu0
        %577 = vdwg.mxu0
        %v580 = vunpack.c.l.b16 %v462
        %v581 = vunpack.c.l.b16 %v463
        %v582 = vpack.c.b16 %v581, %v580
        %v591 = vunpack.c.l.b16 %v464
        %v592 = vunpack.c.l.b16 %v465
        %v593 = vunpack.c.l.b16 %v466
        %v594 = vunpack.c.l.b16 %v467
        %v595 = vunpack.c.l.b16 %v468
        %v596 = vunpack.c.l.b16 %v469
        %v597 = vunpack.c.l.b16 %v470
        %v598 = vunpack.c.l.b16 %v471
        %v599 = vpack.c.b16 %v592, %v591
        %v600 = vpack.c.b16 %v594, %v593
        %v601 = vpack.c.b16 %v596, %v595
        %v602 = vpack.c.b16 %v598, %v597
        %vm607 = vcmask 523264
        %v609 = vsel %vm607, %v582, 0
        %611 = vmatprep.subr.bf16.mxu0 0
        %612 = vmatpush1.bf16.msra.mxu0 0
        %613 = vmatprep.subr.bf16.mxu0 0
        %614 = vmatpush1.bf16.msra.mxu0 0
        %615 = vmatprep.subr.bf16.mxu0 0
        %616 = vmatpush1.bf16.msra.mxu0 0
        %617 = vmatprep.subr.bf16.mxu0 0
        %618 = vmatpush1.bf16.msra.mxu0 0
        %619 = vmatprep.subr.bf16.mxu0 0
        %620 = vmatpush1.bf16.msra.mxu0 %v602
        %621 = vmatprep.subr.bf16.mxu0 0
        %622 = vmatpush1.bf16.msra.mxu0 %v601
        %623 = vmatprep.subr.bf16.mxu0 0
        %624 = vmatpush1.bf16.msra.mxu0 %v600
        %625 = vmatprep.subr.bf16.mxu0 0
        %626 = vmatpush1.bf16.msra.mxu0 %v599
        %627 = vmatprep.subr.bf16.mxu0 0
        %628 = vmatpush2.bf16.msra.mxu0 0
        %629 = vmatprep.subr.bf16.mxu0 0
        %630 = vmatpush2.bf16.msra.mxu0 0
        %631 = vmatprep.subr.bf16.mxu0 0
        %632 = vmatpush2.bf16.msra.mxu0 0
        %633 = vmatprep.subr.bf16.mxu0 0
        %634 = vmatpush2.bf16.msra.mxu0 0
        %635 = vmatprep.subr.bf16.mxu0 0
        %636 = vmatpush2.bf16.msra.mxu0 0
        %637 = vmatprep.subr.bf16.mxu0 0
        %638 = vmatpush2.bf16.msra.mxu0 0
        %639 = vmatprep.subr.bf16.mxu0 0
        %640 = vmatpush2.bf16.msra.mxu0 0
        %641 = vmatprep.subr.bf16.mxu0 0
        %642 = vmatpush2.bf16.msra.mxu0 0
        %643 = vmatprep.mubr.bf16.mxu0 0
        %644 = vmatmul.mubr.bf16.gmra.mxu0 %v609
        %v645 = vpop.f32.mrf.mxu0
        %v646 = vadd.f32 %v572, %v645
        %v647 = vpop.f32.mrf.mxu0
        %v648 = vpop.f32.mrf.mxu0
        %v649 = vadd.f32 %v575, %v648
        %v650 = vpop.f32.mrf.mxu0
        %651 = vdwg.mxu0
        %v652 = vld [vmem:[%s438] sm:$0xff]
        %v653 = vld [vmem:[%s438 + $0x8] sm:$0xff]
        %v654 = vld [vmem:[%s5] sm:$0xf]
        %v655 = vld [vmem:[%s6] sm:$0x1]
        %v657 = vlaneseq
        %v658 = vshrl.u32 %v657, 7
        %v659 = vsub.s32 0, %v658
        %v660 = vrot.slane %v655, %v659
        %vm662 = vcmask 31744
        %v664 = vsel %vm662, %v652, 0
        %v667 = vsel %vm662, %v653, 0
        %vm669 = vcmask 1043456
        %v671 = vsel %vm669, %v654, 0
        %673 = vmatprep.subr.mxu0 0.0
        %674 = vmatpush1.msra.mxu0 0.0
        %675 = vmatprep.subr.mxu0 0.0
        %676 = vmatpush1.msra.mxu0 0.0
        %677 = vmatprep.subr.mxu0 0.0
        %678 = vmatpush1.msra.mxu0 0.0
        %679 = vmatprep.subr.mxu0 0.0
        %680 = vmatpush1.msra.mxu0 0.0
        %681 = vmatprep.subr.mxu0 0.0
        %682 = vmatpush1.msra.mxu0 0.0
        %683 = vmatprep.subr.mxu0 0.0
        %684 = vmatpush1.msra.mxu0 0.0
        %685 = vmatprep.subr.mxu0 0.0
        %686 = vmatpush1.msra.mxu0 0.0
        %687 = vmatprep.subr.mxu0 0.0
        %688 = vmatpush1.msra.mxu0 0.0
        %689 = vmatprep.subr.mxu0 0.0
        %690 = vmatpush1.msra.mxu0 0.0
        %691 = vmatprep.subr.mxu0 0.0
        %692 = vmatpush1.msra.mxu0 0.0
        %693 = vmatprep.subr.mxu0 0.0
        %694 = vmatpush1.msra.mxu0 0.0
        %695 = vmatprep.subr.mxu0 0.0
        %696 = vmatpush1.msra.mxu0 0.0
        %697 = vmatprep.subr.mxu0 0.0
        %698 = vmatpush1.msra.mxu0 0.0
        %699 = vmatprep.subr.mxu0 0.0
        %700 = vmatpush1.msra.mxu0 0.0
        %701 = vmatprep.subr.mxu0 0.0
        %702 = vmatpush1.msra.mxu0 0.0
        %703 = vmatprep.subr.mxu0 0.0
        %704 = vmatpush1.msra.mxu0 %v671
        %705 = vmatprep.subr.mxu0 0.0
        %706 = vmatpush2.msra.mxu0 0.0
        %707 = vmatprep.subr.mxu0 0.0
        %708 = vmatpush2.msra.mxu0 0.0
        %709 = vmatprep.subr.mxu0 0.0
        %710 = vmatpush2.msra.mxu0 0.0
        %711 = vmatprep.subr.mxu0 0.0
        %712 = vmatpush2.msra.mxu0 0.0
        %713 = vmatprep.subr.mxu0 0.0
        %714 = vmatpush2.msra.mxu0 0.0
        %715 = vmatprep.subr.mxu0 0.0
        %716 = vmatpush2.msra.mxu0 0.0
        %717 = vmatprep.subr.mxu0 0.0
        %718 = vmatpush2.msra.mxu0 0.0
        %719 = vmatprep.subr.mxu0 0.0
        %720 = vmatpush2.msra.mxu0 0.0
        %721 = vmatprep.subr.mxu0 0.0
        %722 = vmatpush2.msra.mxu0 0.0
        %723 = vmatprep.subr.mxu0 0.0
        %724 = vmatpush2.msra.mxu0 0.0
        %725 = vmatprep.subr.mxu0 0.0
        %726 = vmatpush2.msra.mxu0 0.0
        %727 = vmatprep.subr.mxu0 0.0
        %728 = vmatpush2.msra.mxu0 0.0
        %729 = vmatprep.subr.mxu0 0.0
        %730 = vmatpush2.msra.mxu0 0.0
        %731 = vmatprep.subr.mxu0 0.0
        %732 = vmatpush2.msra.mxu0 0.0
        %733 = vmatprep.subr.mxu0 0.0
        %734 = vmatpush2.msra.mxu0 0.0
        %735 = vmatprep.subr.mxu0 0.0
        %736 = vmatpush2.msra.mxu0 0.0
        %737 = vmatprep.mubr.f32.mxu0 0.0
        %738 = vmatmul.mubr.f32.gmra.mxu0 %v664
        %v739 = vpop.f32.mrf.mxu0
        %v740 = vadd.f32 %v660, %v739
        %v741 = vpop.f32.mrf.mxu0
        %742 = vmatprep.mubr.f32.mxu0 0.0
        %743 = vmatmul.mubr.f32.gmra.mxu0 %v667
        %v744 = vpop.f32.mrf.mxu0
        %v745 = vadd.f32 %v660, %v744
        %v746 = vpop.f32.mrf.mxu0
        %747 = vdwg.mxu0
        %v748 = vmax.f32 %v740, 0.0
        %v749 = vmax.f32 %v745, 0.0
        %v750 = vpack.c.bf16 %v749, %v748
        %v751 = vld [vmem:[#allocation8] sm:$0xf]
        %v752 = vld [vmem:[#allocation8 + $0x4] sm:$0xf]
        %v753 = vld [vmem:[#allocation8 + $0x8] sm:$0xf]
        %v754 = vld [vmem:[#allocation8 + $0xc] sm:$0xf]
        %v755 = vld [vmem:[#allocation8 + $0x10] sm:$0xf]
        %v756 = vld [vmem:[#allocation8 + $0x14] sm:$0xf]
        %v757 = vld [vmem:[#allocation8 + $0x18] sm:$0xf]
        %v758 = vld [vmem:[#allocation8 + $0x1c] sm:$0xf]
        %v759 = vld [vmem:[#allocation8 + $0x20] sm:$0xf]
        %v760 = vld [vmem:[#allocation8 + $0x24] sm:$0xf]
        %v761 = vld [vmem:[#allocation8 + $0x28] sm:$0xf]
        %v762 = vld [vmem:[#allocation8 + $0x2c] sm:$0xf]
        %v763 = vld [vmem:[#allocation8 + $0x30] sm:$0xf]
        %v764 = vld [vmem:[#allocation8 + $0x34] sm:$0xf]
        %v765 = vld [vmem:[#allocation8 + $0x38] sm:$0xf]
        %v766 = vld [vmem:[#allocation8 + $0x3c] sm:$0xf]
        %v783 = vunpack.c.l.b16 %v751
        %v784 = vunpack.c.l.b16 %v752
        %v785 = vunpack.c.l.b16 %v753
        %v786 = vunpack.c.l.b16 %v754
        %v787 = vunpack.c.l.b16 %v755
        %v788 = vunpack.c.l.b16 %v756
        %v789 = vunpack.c.l.b16 %v757
        %v790 = vunpack.c.l.b16 %v758
        %v791 = vunpack.c.l.b16 %v759
        %v792 = vunpack.c.l.b16 %v760
        %v793 = vunpack.c.l.b16 %v761
        %v794 = vunpack.c.l.b16 %v762
        %v795 = vunpack.c.l.b16 %v763
        %v796 = vunpack.c.l.b16 %v764
        %v797 = vunpack.c.l.b16 %v765
        %v798 = vunpack.c.l.b16 %v766
        %v799 = vpack.c.b16 %v784, %v783
        %v800 = vpack.c.b16 %v786, %v785
        %v801 = vpack.c.b16 %v788, %v787
        %v802 = vpack.c.b16 %v790, %v789
        %v803 = vpack.c.b16 %v792, %v791
        %v804 = vpack.c.b16 %v794, %v793
        %v805 = vpack.c.b16 %v796, %v795
        %v806 = vpack.c.b16 %v798, %v797
        %815 = vmatprep.subr.bf16.mxu0 0
        %816 = vmatpush1.bf16.msra.mxu0 %v806
        %817 = vmatprep.subr.bf16.mxu0 0
        %818 = vmatpush1.bf16.msra.mxu0 %v805
        %819 = vmatprep.subr.bf16.mxu0 0
        %820 = vmatpush1.bf16.msra.mxu0 %v804
        %821 = vmatprep.subr.bf16.mxu0 0
        %822 = vmatpush1.bf16.msra.mxu0 %v803
        %823 = vmatprep.subr.bf16.mxu0 0
        %824 = vmatpush1.bf16.msra.mxu0 %v802
        %825 = vmatprep.subr.bf16.mxu0 0
        %826 = vmatpush1.bf16.msra.mxu0 %v801
        %827 = vmatprep.subr.bf16.mxu0 0
        %828 = vmatpush1.bf16.msra.mxu0 %v800
        %829 = vmatprep.subr.bf16.mxu0 0
        %830 = vmatpush1.bf16.msra.mxu0 %v799
        %831 = vmatprep.subr.bf16.mxu0 0
        %832 = vmatpush2.bf16.msra.mxu0 0
        %833 = vmatprep.subr.bf16.mxu0 0
        %834 = vmatpush2.bf16.msra.mxu0 0
        %835 = vmatprep.subr.bf16.mxu0 0
        %836 = vmatpush2.bf16.msra.mxu0 0
        %837 = vmatprep.subr.bf16.mxu0 0
        %838 = vmatpush2.bf16.msra.mxu0 0
        %839 = vmatprep.subr.bf16.mxu0 0
        %840 = vmatpush2.bf16.msra.mxu0 0
        %841 = vmatprep.subr.bf16.mxu0 0
        %842 = vmatpush2.bf16.msra.mxu0 0
        %843 = vmatprep.subr.bf16.mxu0 0
        %844 = vmatpush2.bf16.msra.mxu0 0
        %845 = vmatprep.subr.bf16.mxu0 0
        %846 = vmatpush2.bf16.msra.mxu0 0
        %847 = vmatprep.mubr.bf16.mxu0 0
        %848 = vmatmul.mubr.bf16.gmra.mxu0 %v750
        %v849 = vpop.f32.mrf.mxu0
        %v850 = vadd.f32 0.0, %v849
        %v851 = vpop.f32.mrf.mxu0
        %v852 = vpop.f32.mrf.mxu0
        %v853 = vadd.f32 0.0, %v852
        %v854 = vpop.f32.mrf.mxu0
        %855 = vdwg.mxu0
        %v856 = vadd.f32 %v646, %v850
        %v857 = vadd.f32 %v649, %v853
        %v858 = vld [vmem:[%s8] sm:$0x1]
        %v860 = vlaneseq
        %v861 = vshrl.u32 %v860, 7
        %v862 = vsub.s32 0, %v861
        %v863 = vrot.slane %v858, %v862
        %v865 = vadd.f32 %v856, %v863
        %v866 = vadd.f32 %v857, %v863
        %867 = vst [vmem:[%s426] sm:$0xff] %v865
        %868 = vst [vmem:[%s426 + $0x8] sm:$0xff] %v866
        %s869 = sand.u32 %s240, 1
        %s870 = scalar_lea.sflag [#allocation4], %s869
        %s871 = sand.u32 %s240, 1
        %s872 = smul.addr %s871, 16
        %s873 = scalar_lea.vmem [#allocation10], %s872
        // Predicated region
        $region73: #{tpu_custom_call.1} parent=55 // pred_check
          %p874 = pneg %p250
        $region74: #{tpu_custom_call.1} parent=55 // pred_check_branch
          %876 = sbr.rel (%p874) target = $region76
        $region75: #{tpu_custom_call.1} parent=55 // pred_region
          %s877 = smul.u32 2, %s28
          %s879 = ssub.s32 256, 256
          %880 = vsyncadd %s870, %s879
          %s881 = smul.addr %s877, 128
          %s882 = scalar_lea.hbm %s9, %s881
          %s883 = sshll.u32 %s873, 4
          %s884 = int_to_ptr.vmem [resolvable:$true] %s883
          %889 = dma.vmem_to_hbm [thread:$0]  %s884, 256, %s882, %s870, 128, 128, 8
        $region76: #{tpu_custom_call.1} parent=55 // pred_fallthru
          _
      $region56: #{tpu_custom_call.1} parent=5 // pred_fallthru
        _
      %p890 = scmp.le.s32.totalorder 2, %s23
      // Predicated region
      $region77: #{tpu_custom_call.1} parent=5 // pred_check
        %p891 = pneg %p890
      $region78: #{tpu_custom_call.1} parent=5 // pred_check_branch
        %893 = sbr.rel (%p891) target = $region80
      $region79: #{tpu_custom_call.1} parent=5 // pred_region
        %s894 = ssub.s32 %s23, 2
        // Predicated region
        $region81: #{tpu_custom_call.1} parent=79 // pred_check
          %p895 = pneg %p256
        $region82: #{tpu_custom_call.1} parent=79 // pred_check_branch
          %897 = sbr.rel (%p895) target = $region84
        $region83: #{tpu_custom_call.1} parent=79 // pred_region
          %s898 = sand.u32 %s241, 1
          %s899 = scalar_lea.sflag [#allocation4], %s898
          %s900 = sand.u32 %s241, 1
          %s901 = smul.addr %s900, 16
          %s902 = scalar_lea.vmem [#allocation10], %s901
          %903 = dma.done %s899, 256
        $region84: #{tpu_custom_call.1} parent=79 // pred_fallthru
          _
      $region80: #{tpu_custom_call.1} parent=5 // pred_fallthru
        _
    $region6: #{tpu_custom_call.1} parent=1 // loop_footer
      %s27 = sadd.s32 1, %s23
    $region7: #{tpu_custom_call.1} parent=1 // loop_footer_branch
      %22 = sbr.rel target = $region3
    $region8: #{tpu_custom_call.1} parent=1 // loop_exit
      _
    %904 = vsyncpa [#allocation3], 1
    %s905 = scalar_lea.sflag [#allocation3], 1
    %906 = vsyncpa %s905, 1
    %907 = vsyncpa [#allocation6], 1
    %908 = vsyncpa [#allocation9], 1
    %909 = vsyncpa [#allocation4], 1
    %s910 = scalar_lea.sflag [#allocation4], 1
    %911 = vsyncpa %s910, 1

</llo_original>
